<compile_context>
chip_gen: v7x
topology: tpu7x:2x2x1
jax: 0.10.0
libtpu: 0.0.40
codegen_flags: <defaults>
</compile_context>

<pallas_src>
import functools

import jax
import jax.numpy as jnp
from jax import lax
from jax.experimental import pallas as pl
from jax.experimental.pallas import tpu as pltpu

_SENTINEL = 1.0e8   # only breaks if real coords approach ~1e8 (f32 ULP ~8 there)
_STRIP = 16         # x1 rows processed per fused inner-loop step


def _cdiv(a, b):
    return (a + b - 1) // b


def _round_up(x, m):
    return _cdiv(x, m) * m


def _chamfer_kernel(x1_ref, x2_ref, d1_out_ref, sum2_ref, d1_scr, d2_scr, *,
                    m_total, m_core_pad, tn, tm):
    core = pl.program_id(1)
    nt = pl.program_id(2)            # x1 (N) tile index — outer loop
    mt = pl.program_id(3)            # x2 (M) tile index — inner loop
    n_last = pl.num_programs(2) - 1
    m_last = pl.num_programs(3) - 1

    # First visit of this (batch, core) output block: zero the dist2 sum.
    @pl.when(jnp.logical_and(nt == 0, mt == 0))
    def _():
        sum2_ref[...] = jnp.zeros_like(sum2_ref)

    # Start of the M sweep for this N tile: reset the per-row running min.
    @pl.when(mt == 0)
    def _():
        d1_scr[...] = jnp.full((tn, 1), jnp.inf, dtype=jnp.float32)

    # Fused distances + reductions over 16-row strips of the x1 tile.  The
    # (_STRIP, tm) distance block lives entirely in vregs; x2 coordinate rows
    # are re-loaded per strip to keep live ranges short (VMEM loads are cheap).
    def strip_body(i, row_min):
        off = pl.multiple_of(i * _STRIP, _STRIP)
        x1s = x1_ref[pl.ds(off, _STRIP), :]                    # (S, 3)
        dx = x1s[:, 0:1] - x2_ref[0:1, :]
        d = dx * dx
        dy = x1s[:, 1:2] - x2_ref[1:2, :]
        d = d + dy * dy
        dz = x1s[:, 2:3] - x2_ref[2:3, :]
        d = d + dz * dz                                        # (S, tm)
        # dist1: nearest x2 point for each x1 row in this strip (lane reduce).
        col_min = jnp.min(d, axis=1, keepdims=True)            # (S, 1)
        d1_scr[pl.ds(off, _STRIP), :] = jnp.minimum(
            d1_scr[pl.ds(off, _STRIP), :], col_min)
        # dist2: nearest x1 row seen so far for each x2 point (sublane reduce).
        return jnp.minimum(row_min, jnp.min(d, axis=0, keepdims=True))

    row_min = lax.fori_loop(0, tn // _STRIP, strip_body,
                            jnp.full((1, tm), jnp.inf, dtype=jnp.float32))

    # Fold this N tile into the persistent lane-dense dist2 running min.
    lane0 = pl.multiple_of(mt * tm, 128)

    @pl.when(nt == 0)
    def _():
        d2_scr[:, pl.ds(lane0, tm)] = row_min

    @pl.when(nt != 0)
    def _():
        d2_scr[:, pl.ds(lane0, tm)] = jnp.minimum(
            d2_scr[:, pl.ds(lane0, tm)], row_min)

    # dist1 for this N tile is final once the whole M range has been visited.
    @pl.when(mt == m_last)
    def _():
        d1_out_ref[...] = d1_scr[...]

    # dist2 for this M tile is final once the whole N range has been visited:
    # mask padded x2 points and add into the per-(batch, core) running sum.
    @pl.when(nt == n_last)
    def _():
        gidx = (lax.broadcasted_iota(jnp.int32, (1, tm), 1)
                + core * m_core_pad + mt * tm)
        vals = d2_scr[:, pl.ds(lane0, tm)]
        sum2_ref[...] += jnp.sum(jnp.where(gidx < m_total, vals, 0.0))


def chamfer_distance_l2(xyz1, xyz2, ignore_zeros=False, *,
                        tn_max=1024, tm_max=1024, n_cores=2):
    """ChamferDistanceL2.forward: mean(min sq dist 1->2) + mean(min sq dist 2->1)."""
    # TODO(synk): ignore_zeros=True (batch==1 data-dependent point filtering)
    # changes shapes dynamically and has no static Pallas form; not implemented.
    assert xyz1.ndim == 3 and xyz2.ndim == 3
    assert xyz1.shape[0] == xyz2.shape[0]
    assert xyz1.shape[2] == 3 and xyz2.shape[2] == 3
    B, N, _ = xyz1.shape
    _, M, _ = xyz2.shape

    xyz1 = xyz1.astype(jnp.float32)
    xyz2 = xyz2.astype(jnp.float32)

    # Adaptive tile sizes: waste capped at <_STRIP rows / <128 lanes per tile.
    n_tiles = _cdiv(N, tn_max)
    tn = _round_up(_cdiv(N, n_tiles), _STRIP)
    n_pad = n_tiles * tn

    m_core = _cdiv(M, n_cores)                 # M range handled per TensorCore
    m_tiles = _cdiv(m_core, tm_max)
    tm = _round_up(_cdiv(m_core, m_tiles), 128)
    m_core_pad = m_tiles * tm

    x1p = jnp.pad(xyz1, ((0, 0), (0, n_pad - N), (0, 0)),
                  constant_values=_SENTINEL)
    x2p = jnp.pad(xyz2, ((0, 0), (0, n_cores * m_core_pad - M), (0, 0)),
                  constant_values=_SENTINEL)
    # (B, n_cores, 3, m_core_pad): x2 points lane-dense, split across cores.
    x2r = jnp.transpose(x2p.reshape(B, n_cores, m_core_pad, 3), (0, 1, 3, 2))

    kernel = functools.partial(_chamfer_kernel, m_total=M,
                               m_core_pad=m_core_pad, tn=tn, tm=tm)

    d1_part, sum2 = pl.pallas_call(
        kernel,
        out_shape=(
            jax.ShapeDtypeStruct((B, n_cores, n_pad, 1), jnp.float32),
            jax.ShapeDtypeStruct((B, n_cores, 1, 1), jnp.float32),
        ),
        grid=(B, n_cores, n_tiles, m_tiles),
        in_specs=[
            pl.BlockSpec((None, tn, 3), lambda b, c, nt, mt: (b, nt, 0)),
            pl.BlockSpec((None, None, 3, tm), lambda b, c, nt, mt: (b, c, 0, mt)),
        ],
        out_specs=(
            pl.BlockSpec((None, None, tn, 1), lambda b, c, nt, mt: (b, c, nt, 0)),
            pl.BlockSpec((None, None, 1, 1), lambda b, c, nt, mt: (b, c, 0, 0)),
        ),
        scratch_shapes=[
            pltpu.VMEM((tn, 1), jnp.float32),           # dist1 running min (tile)
            pltpu.VMEM((1, m_core_pad), jnp.float32),   # dist2 running min (core)
        ],
        compiler_params=pltpu.CompilerParams(
            dimension_semantics=("parallel", "parallel",
                                 "arbitrary", "arbitrary")),
    )(x1p, x2r)

    # Combine per-core dist1 partial minima, mask padded rows, take means.
    dist1 = jnp.min(d1_part[..., 0], axis=1)                    # (B, n_pad)
    valid = (jnp.arange(n_pad) < N)[None, :]
    sum1 = jnp.sum(jnp.where(valid, dist1, 0.0))
    return sum1 / (B * N) + jnp.sum(sum2) / (B * M)


def _reference(xyz1, xyz2):
    d = jnp.sum((xyz1[:, :, None, :] - xyz2[:, None, :, :]) ** 2, axis=-1)
    return jnp.mean(jnp.min(d, axis=2)) + jnp.mean(jnp.min(d, axis=1))


if __name__ == "__main__":
    key = jax.random.PRNGKey(0)
    k1, k2, k3, k4, k5, k6 = jax.random.split(key, 6)

    # Case 1: aligned small shapes, single tile per axis.
    a1 = jax.random.normal(k1, (2, 128, 3), dtype=jnp.float32)
    b1 = jax.random.normal(k2, (2, 64, 3), dtype=jnp.float32)
    out1 = jax.block_until_ready(jax.jit(chamfer_distance_l2)(a1, b1))
    ref1 = _reference(a1, b1)
    assert jnp.isfinite(out1), "non-finite output"
    assert jnp.allclose(out1, ref1, rtol=1e-4, atol=1e-5), (out1, ref1)

    # Case 2: unaligned point counts (exercises padding + masking + empty core).
    a2 = jax.random.normal(k3, (3, 100, 3), dtype=jnp.float32)
    b2 = jax.random.normal(k4, (3, 75, 3), dtype=jnp.float32)
    out2 = jax.block_until_ready(jax.jit(chamfer_distance_l2)(a2, b2))
    ref2 = _reference(a2, b2)
    assert jnp.allclose(out2, ref2, rtol=1e-4, atol=1e-5), (out2, ref2)

    # Case 3: multi-tile path on both axes at small shapes (small tile caps
    # exercise the running-min accumulators across nt > 0 and mt > 0).
    a3 = jax.random.normal(k5, (1, 300, 3), dtype=jnp.float32)
    b3 = jax.random.normal(k6, (1, 520, 3), dtype=jnp.float32)
    small = jax.jit(functools.partial(chamfer_distance_l2, tn_max=128, tm_max=128))
    out3 = jax.block_until_ready(small(a3, b3))
    ref3 = _reference(a3, b3)
    assert jnp.allclose(out3, ref3, rtol=1e-4, atol=1e-5), (out3, ref3)

    print("KERNEL_OK")
</pallas_src>

<mosaic_0001>
module attributes {stable_mosaic.version = 11 : i64} {
  func.func @_chamfer_kernel(%arg0: i32, %arg1: i32, %arg2: i32, %arg3: i32, %arg4: memref<1x128x3xf32, #tpu.memory_space<vmem>>, %arg5: memref<1x1x3x128xf32, #tpu.memory_space<vmem>>, %arg6: memref<1x1x128x1xf32, #tpu.memory_space<vmem>>, %arg7: memref<1x1x1x1xf32, #tpu.memory_space<vmem>>, %arg8: memref<128x1xf32, #tpu.memory_space<vmem>>, %arg9: memref<1x128xf32, #tpu.memory_space<vmem>>) attributes {dimension_semantics = [#tpu.dimension_semantics<parallel>, #tpu.dimension_semantics<parallel>, #tpu.dimension_semantics<arbitrary>, #tpu.dimension_semantics<arbitrary>], iteration_bounds = array<i64: 2, 2, 1, 1>, scalar_prefetch = 0 : i64, scratch_operands = 2 : i64, tpu.core_type = #tpu.core_type<tc>, window_params = [{transform_indices = @transform_0, window_bounds = array<i64: 1, 128, 3>}, {transform_indices = @transform_1, window_bounds = array<i64: 1, 1, 3, 128>}, {transform_indices = @transform_2, window_bounds = array<i64: 1, 1, 128, 1>}, {transform_indices = @transform_3, window_bounds = array<i64: 1, 1, 1, 1>}]} {
    %c0_i32 = arith.constant 0 : i32
    %0 = arith.cmpi eq, %arg2, %c0_i32 : i32
    %c0_i32_0 = arith.constant 0 : i32
    %1 = arith.cmpi eq, %arg3, %c0_i32_0 : i32
    %2 = arith.andi %0, %1 : i1
    %3 = arith.extui %2 : i1 to i32
    %c0_i32_1 = arith.constant 0 : i32
    %4 = arith.cmpi ne, %3, %c0_i32_1 : i32
    scf.if %4 {
      %cst_14 = arith.constant 0.000000e+00 : f32
      %25 = vector.broadcast %cst_14 : f32 to vector<1x1xf32>
      %c0 = arith.constant 0 : index
      %c0_15 = arith.constant 0 : index
      %c0_16 = arith.constant 0 : index
      %c0_17 = arith.constant 0 : index
      %26 = vector.load %arg7[%c0, %c0_15, %c0_16, %c0_17] : memref<1x1x1x1xf32, #tpu.memory_space<vmem>>, vector<1x1x1x1xf32>
      %27 = vector.shape_cast %26 : vector<1x1x1x1xf32> to vector<1x1xf32>
      %28 = vector.shape_cast %25 : vector<1x1xf32> to vector<1x1x1x1xf32>
      tpu.vector_store %arg7[%c0, %c0_15, %c0_16, %c0_17], %28 {strides = array<i32>} : memref<1x1x1x1xf32, #tpu.memory_space<vmem>>, vector<1x1x1x1xf32>,
    } else {
    }
    %c0_i32_2 = arith.constant 0 : i32
    %5 = arith.cmpi eq, %arg3, %c0_i32_2 : i32
    %6 = arith.extui %5 : i1 to i32
    %c0_i32_3 = arith.constant 0 : i32
    %7 = arith.cmpi ne, %6, %c0_i32_3 : i32
    scf.if %7 {
      %cst_14 = arith.constant 0x7F800000 : f32
      %25 = vector.broadcast %cst_14 : f32 to vector<128x1xf32>
      %c0 = arith.constant 0 : index
      %c0_15 = arith.constant 0 : index
      %26 = vector.load %arg8[%c0, %c0_15] : memref<128x1xf32, #tpu.memory_space<vmem>>, vector<128x1xf32>
      tpu.vector_store %arg8[%c0, %c0_15], %25 {strides = array<i32>} : memref<128x1xf32, #tpu.memory_space<vmem>>, vector<128x1xf32>,
    } else {
    }
    %cst = arith.constant 0x7F800000 : f32
    %8 = vector.broadcast %cst : f32 to vector<1x128xf32>
    %c0_i32_4 = arith.constant 0 : i32
    %c8_i32 = arith.constant 8 : i32
    %9 = arith.addi %c0_i32_4, %c8_i32 : i32
    %c1_i32 = arith.constant 1 : i32
    %10 = scf.for %arg10 = %c0_i32_4 to %9 step %c1_i32 iter_args(%arg11 = %8) -> (vector<1x128xf32>)  : i32 {
      %c16_i32 = arith.constant 16 : i32
      %25 = arith.muli %arg10, %c16_i32 : i32
      %26 = tpu.assume_multiple %25, 16 : i32
      %c0 = arith.constant 0 : index
      %27 = arith.index_cast %26 : i32 to index
      %c0_14 = arith.constant 0 : index
      %28 = vector.load %arg4[%c0, %27, %c0_14] : memref<1x128x3xf32, #tpu.memory_space<vmem>>, vector<1x16x3xf32>
      %29 = vector.shape_cast %28 : vector<1x16x3xf32> to vector<16x3xf32>
      %30 = vector.extract_strided_slice %29 {offsets = [0, 0], sizes = [16, 1], strides = [1, 1]} : vector<16x3xf32> to vector<16x1xf32>
      %c0_15 = arith.constant 0 : index
      %c0_16 = arith.constant 0 : index
      %c0_17 = arith.constant 0 : index
      %c0_18 = arith.constant 0 : index
      %31 = vector.load %arg5[%c0_15, %c0_16, %c0_17, %c0_18] : memref<1x1x3x128xf32, #tpu.memory_space<vmem>>, vector<1x1x1x128xf32>
      %32 = vector.shape_cast %31 : vector<1x1x1x128xf32> to vector<1x128xf32>
      %33 = vector.broadcast %30 : vector<16x1xf32> to vector<16x128xf32>
      %34 = vector.broadcast %32 : vector<1x128xf32> to vector<16x128xf32>
      %35 = arith.subf %33, %34 : vector<16x128xf32>
      %36 = arith.mulf %35, %35 : vector<16x128xf32>
      %37 = vector.extract_strided_slice %29 {offsets = [0, 1], sizes = [16, 1], strides = [1, 1]} : vector<16x3xf32> to vector<16x1xf32>
      %c0_19 = arith.constant 0 : index
      %c0_20 = arith.constant 0 : index
      %c1 = arith.constant 1 : index
      %c0_21 = arith.constant 0 : index
      %38 = vector.load %arg5[%c0_19, %c0_20, %c1, %c0_21] : memref<1x1x3x128xf32, #tpu.memory_space<vmem>>, vector<1x1x1x128xf32>
      %39 = vector.shape_cast %38 : vector<1x1x1x128xf32> to vector<1x128xf32>
      %40 = vector.broadcast %37 : vector<16x1xf32> to vector<16x128xf32>
      %41 = vector.broadcast %39 : vector<1x128xf32> to vector<16x128xf32>
      %42 = arith.subf %40, %41 : vector<16x128xf32>
      %43 = arith.mulf %42, %42 : vector<16x128xf32>
      %44 = arith.addf %36, %43 : vector<16x128xf32>
      %45 = vector.extract_strided_slice %29 {offsets = [0, 2], sizes = [16, 1], strides = [1, 1]} : vector<16x3xf32> to vector<16x1xf32>
      %c0_22 = arith.constant 0 : index
      %c0_23 = arith.constant 0 : index
      %c2 = arith.constant 2 : index
      %c0_24 = arith.constant 0 : index
      %46 = vector.load %arg5[%c0_22, %c0_23, %c2, %c0_24] : memref<1x1x3x128xf32, #tpu.memory_space<vmem>>, vector<1x1x1x128xf32>
      %47 = vector.shape_cast %46 : vector<1x1x1x128xf32> to vector<1x128xf32>
      %48 = vector.broadcast %45 : vector<16x1xf32> to vector<16x128xf32>
      %49 = vector.broadcast %47 : vector<1x128xf32> to vector<16x128xf32>
      %50 = arith.subf %48, %49 : vector<16x128xf32>
      %51 = arith.mulf %50, %50 : vector<16x128xf32>
      %52 = arith.addf %44, %51 : vector<16x128xf32>
      %cst_25 = arith.constant dense<0x7F800000> : vector<16xf32>
      %53 = vector.multi_reduction <minimumf>, %52, %cst_25 [1] : vector<16x128xf32> to vector<16xf32>
      %54 = vector.shape_cast %53 : vector<16xf32> to vector<16x1xf32>
      %55 = arith.index_cast %26 : i32 to index
      %c0_26 = arith.constant 0 : index
      %56 = vector.load %arg8[%55, %c0_26] : memref<128x1xf32, #tpu.memory_space<vmem>>, vector<16x1xf32>
      %57 = arith.minimumf %56, %54 : vector<16x1xf32>
      %58 = arith.index_cast %26 : i32 to index
      %c0_27 = arith.constant 0 : index
      %59 = vector.load %arg8[%58, %c0_27] : memref<128x1xf32, #tpu.memory_space<vmem>>, vector<16x1xf32>
      tpu.vector_store %arg8[%58, %c0_27], %57 {strides = array<i32>} : memref<128x1xf32, #tpu.memory_space<vmem>>, vector<16x1xf32>,
      %cst_28 = arith.constant dense<0x7F800000> : vector<128xf32>
      %60 = vector.multi_reduction <minimumf>, %52, %cst_28 [0] : vector<16x128xf32> to vector<128xf32>
      %61 = vector.shape_cast %60 : vector<128xf32> to vector<1x128xf32>
      %62 = arith.minimumf %arg11, %61 : vector<1x128xf32>
      scf.yield %62 : vector<1x128xf32>
    }
    %c8_i32_5 = arith.constant 8 : i32
    %c128_i32 = arith.constant 128 : i32
    %11 = arith.muli %arg3, %c128_i32 : i32
    %12 = tpu.assume_multiple %11, 128 : i32
    %c0_i32_6 = arith.constant 0 : i32
    %13 = arith.cmpi eq, %arg2, %c0_i32_6 : i32
    %14 = arith.extui %13 : i1 to i32
    %c0_i32_7 = arith.constant 0 : i32
    %15 = arith.cmpi ne, %14, %c0_i32_7 : i32
    scf.if %15 {
      %c0 = arith.constant 0 : index
      %25 = arith.index_cast %12 : i32 to index
      %26 = vector.load %arg9[%c0, %25] : memref<1x128xf32, #tpu.memory_space<vmem>>, vector<1x128xf32>
      tpu.vector_store %arg9[%c0, %25], %10 {strides = array<i32>} : memref<1x128xf32, #tpu.memory_space<vmem>>, vector<1x128xf32>,
    } else {
    }
    %c0_i32_8 = arith.constant 0 : i32
    %16 = arith.cmpi ne, %arg2, %c0_i32_8 : i32
    %17 = arith.extui %16 : i1 to i32
    %c0_i32_9 = arith.constant 0 : i32
    %18 = arith.cmpi ne, %17, %c0_i32_9 : i32
    scf.if %18 {
      %c0 = arith.constant 0 : index
      %25 = arith.index_cast %12 : i32 to index
      %26 = vector.load %arg9[%c0, %25] : memref<1x128xf32, #tpu.memory_space<vmem>>, vector<1x128xf32>
      %27 = arith.minimumf %26, %10 : vector<1x128xf32>
      %c0_14 = arith.constant 0 : index
      %28 = arith.index_cast %12 : i32 to index
      %29 = vector.load %arg9[%c0_14, %28] : memref<1x128xf32, #tpu.memory_space<vmem>>, vector<1x128xf32>
      tpu.vector_store %arg9[%c0_14, %28], %27 {strides = array<i32>} : memref<1x128xf32, #tpu.memory_space<vmem>>, vector<1x128xf32>,
    } else {
    }
    %c0_i32_10 = arith.constant 0 : i32
    %19 = arith.cmpi eq, %arg3, %c0_i32_10 : i32
    %20 = arith.extui %19 : i1 to i32
    %c0_i32_11 = arith.constant 0 : i32
    %21 = arith.cmpi ne, %20, %c0_i32_11 : i32
    scf.if %21 {
      %c0 = arith.constant 0 : index
      %c0_14 = arith.constant 0 : index
      %25 = vector.load %arg8[%c0, %c0_14] : memref<128x1xf32, #tpu.memory_space<vmem>>, vector<128x1xf32>
      %c0_15 = arith.constant 0 : index
      %c0_16 = arith.constant 0 : index
      %c0_17 = arith.constant 0 : index
      %c0_18 = arith.constant 0 : index
      %26 = vector.load %arg6[%c0_15, %c0_16, %c0_17, %c0_18] : memref<1x1x128x1xf32, #tpu.memory_space<vmem>>, vector<1x1x128x1xf32>
      %27 = vector.shape_cast %26 : vector<1x1x128x1xf32> to vector<128x1xf32>
      %28 = vector.shape_cast %25 : vector<128x1xf32> to vector<1x1x128x1xf32>
      tpu.vector_store %arg6[%c0_15, %c0_16, %c0_17, %c0_18], %28 {strides = array<i32>} : memref<1x1x128x1xf32, #tpu.memory_space<vmem>>, vector<1x1x128x1xf32>,
    } else {
    }
    %c0_i32_12 = arith.constant 0 : i32
    %22 = arith.cmpi eq, %arg2, %c0_i32_12 : i32
    %23 = arith.extui %22 : i1 to i32
    %c0_i32_13 = arith.constant 0 : i32
    %24 = arith.cmpi ne, %23, %c0_i32_13 : i32
    scf.if %24 {
      %25 = tpu.iota {dimensions = array<i32: 1>} : vector<1x128xi32>
      %c128_i32_14 = arith.constant 128 : i32
      %26 = arith.muli %arg1, %c128_i32_14 : i32
      %27 = vector.broadcast %26 : i32 to vector<1x128xi32>
      %28 = arith.addi %25, %27 : vector<1x128xi32>
      %c128_i32_15 = arith.constant 128 : i32
      %29 = arith.muli %arg3, %c128_i32_15 : i32
      %30 = vector.broadcast %29 : i32 to vector<1x128xi32>
      %31 = arith.addi %28, %30 : vector<1x128xi32>
      %c0 = arith.constant 0 : index
      %32 = arith.index_cast %12 : i32 to index
      %33 = vector.load %arg9[%c0, %32] : memref<1x128xf32, #tpu.memory_space<vmem>>, vector<1x128xf32>
      %c0_16 = arith.constant 0 : index
      %c0_17 = arith.constant 0 : index
      %c0_18 = arith.constant 0 : index
      %c0_19 = arith.constant 0 : index
      %34 = vector.load %arg7[%c0_16, %c0_17, %c0_18, %c0_19] : memref<1x1x1x1xf32, #tpu.memory_space<vmem>>, vector<1x1x1x1xf32>
      %35 = vector.shape_cast %34 : vector<1x1x1x1xf32> to vector<1x1xf32>
      %c64_i32 = arith.constant 64 : i32
      %36 = vector.broadcast %c64_i32 : i32 to vector<1x128xi32>
      %37 = arith.cmpi slt, %31, %36 : vector<1x128xi32>
      %cst_20 = arith.constant 0.000000e+00 : f32
      %38 = vector.broadcast %cst_20 : f32 to vector<1x128xf32>
      %39 = arith.select %37, %33, %38 : vector<1x128xi1>, vector<1x128xf32>
      %40 = vector.shape_cast %39 : vector<1x128xf32> to vector<1x1x128xf32>
      %cst_21 = arith.constant dense<0.000000e+00> : vector<1xf32>
      %41 = vector.multi_reduction <add>, %40, %cst_21 [1, 2] : vector<1x1x128xf32> to vector<1xf32>
      %42 = vector.shape_cast %41 : vector<1xf32> to vector<1x1x1xf32>
      %43 = vector.extract %42[0, 0, 0] : f32 from vector<1x1x1xf32>
      %44 = vector.broadcast %43 : f32 to vector<1x1xf32>
      %45 = arith.addf %35, %44 : vector<1x1xf32>
      %c0_22 = arith.constant 0 : index
      %c0_23 = arith.constant 0 : index
      %c0_24 = arith.constant 0 : index
      %c0_25 = arith.constant 0 : index
      %46 = vector.load %arg7[%c0_22, %c0_23, %c0_24, %c0_25] : memref<1x1x1x1xf32, #tpu.memory_space<vmem>>, vector<1x1x1x1xf32>
      %47 = vector.shape_cast %46 : vector<1x1x1x1xf32> to vector<1x1xf32>
      %48 = vector.shape_cast %45 : vector<1x1xf32> to vector<1x1x1x1xf32>
      tpu.vector_store %arg7[%c0_22, %c0_23, %c0_24, %c0_25], %48 {strides = array<i32>} : memref<1x1x1x1xf32, #tpu.memory_space<vmem>>, vector<1x1x1x1xf32>,
    } else {
    }
    return
  }
  func.func @transform_0(%arg0: i32, %arg1: i32, %arg2: i32, %arg3: i32) -> (i32, i32, i32) {
    %c0_i32 = arith.constant 0 : i32
    %c0_i32_0 = arith.constant 0 : i32
    return %arg0, %arg2, %c0_i32 : i32, i32, i32
  }
  func.func @transform_1(%arg0: i32, %arg1: i32, %arg2: i32, %arg3: i32) -> (i32, i32, i32, i32) {
    %c0_i32 = arith.constant 0 : i32
    %c0_i32_0 = arith.constant 0 : i32
    return %arg0, %arg1, %c0_i32, %arg3 : i32, i32, i32, i32
  }
  func.func @transform_2(%arg0: i32, %arg1: i32, %arg2: i32, %arg3: i32) -> (i32, i32, i32, i32) {
    %c0_i32 = arith.constant 0 : i32
    %c0_i32_0 = arith.constant 0 : i32
    return %arg0, %arg1, %arg2, %c0_i32 : i32, i32, i32, i32
  }
  func.func @transform_3(%arg0: i32, %arg1: i32, %arg2: i32, %arg3: i32) -> (i32, i32, i32, i32) {
    %c0_i32 = arith.constant 0 : i32
    %c0_i32_0 = arith.constant 0 : i32
    %c0_i32_1 = arith.constant 0 : i32
    return %arg0, %arg1, %c0_i32, %c0_i32_0 : i32, i32, i32, i32
  }
}

</mosaic_0001>

<llo_original>
// kernel: chamfer_distance_l2.1
$region0: #{chamfer_distance_l2.1}
  #allocation0 [shape = 'u32[]', space=smem, size = 0x4, offset = 0x4, fixed_abs, tag = 'smem constant byte address 0x4 - core index']
  #allocation1 [shape = 'u32[144,128]{1,0:T(1,128)}', space=vmem, size = 0x12000, scoped, tag = 'internal scratch']
  #allocation2 [shape = 'f32[128,1]{1,0:T(8,128)}', space=vmem, size = 0x10000, scoped, tag = 'scratch operand']
  #allocation3 [shape = 'f32[1,128]{1,0:T(1,128)}', space=vmem, size = 0x200, scoped, tag = 'scratch operand']
  %s0 = inlined_call_operand.vmem [shape: f32[2,128,3], index: 0, kind: input, shape index: {}]
  %s1 = inlined_call_operand.vmem [shape: f32[2,2,3,128], index: 1, kind: input, shape index: {}]
  %s2 = inlined_call_operand.vmem [shape: f32[2,2,128,1], index: 2, kind: output, shape index: {0}]
  %s3 = inlined_call_operand.vmem [shape: f32[2,2,1,1], index: 3, kind: output, shape index: {1}]
  %4 = xla_tuple %s2, %s3
  %s5 = sld [smem:[#allocation0]]
  $region80: #{chamfer_distance_l2.1} parent=0
    _
  %s7 = ssub.s32 1, %s5
  %s8 = scalar_select 0, %s7, %s5
  loop: start=0, step=1, limit=6
  $region2: #{chamfer_distance_l2.1} parent=0 // loop_pre_header
    _
  $region3: #{chamfer_distance_l2.1} parent=0 // loop_header
    %s10 = sphi 0, %s14
    %p11 = scmp.ge.s32.totalorder %s10, 6
    %s17 = sphi 0, %s43
    %s18 = sphi 0, %s39
    %s19 = sphi 0, %s35
    %s20 = sphi 0, %s31
    %s21 = sphi 0, %s17
    %s22 = sphi 0, %s18
    %s23 = sphi 0, %s19
    %s24 = sphi 0, %s20
    %s25 = sphi 0, %s21
    %s26 = sphi 0, %s22
    %s27 = sphi 0, %s23
    %s28 = sphi 0, %s24
    %s48 = sphi 0, %s50
    %s51 = sphi 0, %s48
    %s52 = sphi 0, %s51
    %s68 = sphi 0, %s52
    %s78 = sphi 0, %s80
    %s81 = sphi 0, %s78
    %s82 = sphi 0, %s81
    %s98 = sphi 0, %s82
    %s108 = sphi 0, %s110
    %s111 = sphi 0, %s108
    %s112 = sphi 0, %s111
    %s128 = sphi 0, %s112
    %s136 = sphi 0, %s138
    %s139 = sphi 0, %s136
    %s140 = sphi 0, %s139
    %s156 = sphi 0, %s140
  $region4: #{chamfer_distance_l2.1} parent=0 // loop_header_branch
    %13 = sbr.rel (%p11) target = $region8
  $region5: #{chamfer_distance_l2.1} parent=0 // loop_body
    %s15 = ssub.s32 %s10, 1
    %s16 = ssub.s32 %s10, 2
    %s29 = sadd.s32 1, %s20
    %p30 = scmp.ge.s32.totalorder %s29, 1
    %s31 = scalar_select %p30, 0, %s29
    %s32 = sadd.s32 1, %s19
    %s33 = scalar_select %p30, %s32, %s19
    %p34 = scmp.ge.s32.totalorder %s33, 1
    %s35 = scalar_select %p34, 0, %s33
    %s36 = sadd.s32 1, %s18
    %s37 = scalar_select %p34, %s36, %s18
    %p38 = scmp.ge.s32.totalorder %s37, 2
    %s39 = scalar_select %p38, 0, %s37
    %s40 = sadd.s32 1, %s17
    %s41 = scalar_select %p38, %s40, %s17
    %p42 = scmp.ge.s32.totalorder %s41, 2
    %s43 = scalar_select %p42, 0, %s41
    %s44 = ssub.s32 %s17, %s43
    %s45 = ssub.s32 %s19, %s35
    %s46 = sor.u32 %s44, %s45
    %p47 = scmp.eq.s32.totalorder %s46, 0
    %s49 = sadd.s32 %s48, 1
    %s50 = scalar_select %p47, %s48, %s49
    %p53 = pneg %p47
    %p54 = scmp.eq.s32.totalorder %s10, 3
    %p55 = por %p53, %p54
    %p56 = scmp.ne.s32.totalorder %s48, %s51
    %p57 = scmp.eq.s32.totalorder %s10, 0
    %p58 = por %p56, %p57
    %p59 = scmp.ne.s32.totalorder %s48, %s51
    %p60 = scmp.eq.s32.totalorder %s15, 3
    %p61 = por %p59, %p60
    %p62 = scmp.ne.s32.totalorder %s51, %s52
    %p63 = scmp.eq.s32.totalorder %s15, 0
    %p64 = por %p62, %p63
    %p65 = scmp.ne.s32.totalorder %s51, %s52
    %p66 = scmp.eq.s32.totalorder %s16, 3
    %p67 = por %p65, %p66
    %p69 = scmp.ne.s32.totalorder %s52, %s68
    %p70 = scmp.eq.s32.totalorder %s16, 0
    %p71 = por %p69, %p70
    %s72 = ssub.s32 %s17, %s43
    %s73 = ssub.s32 %s18, %s39
    %s74 = sor.u32 %s72, %s73
    %s75 = ssub.s32 %s20, %s31
    %s76 = sor.u32 %s74, %s75
    %p77 = scmp.eq.s32.totalorder %s76, 0
    %s79 = sadd.s32 %s78, 1
    %s80 = scalar_select %p77, %s78, %s79
    %p83 = pneg %p77
    %p84 = scmp.eq.s32.totalorder %s10, 3
    %p85 = por %p83, %p84
    %p86 = scmp.ne.s32.totalorder %s78, %s81
    %p87 = scmp.eq.s32.totalorder %s10, 0
    %p88 = por %p86, %p87
    %p89 = scmp.ne.s32.totalorder %s78, %s81
    %p90 = scmp.eq.s32.totalorder %s15, 3
    %p91 = por %p89, %p90
    %p92 = scmp.ne.s32.totalorder %s81, %s82
    %p93 = scmp.eq.s32.totalorder %s15, 0
    %p94 = por %p92, %p93
    %p95 = scmp.ne.s32.totalorder %s81, %s82
    %p96 = scmp.eq.s32.totalorder %s16, 3
    %p97 = por %p95, %p96
    %p99 = scmp.ne.s32.totalorder %s82, %s98
    %p100 = scmp.eq.s32.totalorder %s16, 0
    %p101 = por %p99, %p100
    %s102 = ssub.s32 %s17, %s43
    %s103 = ssub.s32 %s18, %s39
    %s104 = sor.u32 %s102, %s103
    %s105 = ssub.s32 %s19, %s35
    %s106 = sor.u32 %s104, %s105
    %p107 = scmp.eq.s32.totalorder %s106, 0
    %s109 = sadd.s32 %s108, 1
    %s110 = scalar_select %p107, %s108, %s109
    %p113 = pneg %p107
    %p114 = scmp.eq.s32.totalorder %s10, 3
    %p115 = por %p113, %p114
    %p116 = scmp.ne.s32.totalorder %s108, %s111
    %p117 = scmp.eq.s32.totalorder %s10, 0
    %p118 = por %p116, %p117
    %p119 = scmp.ne.s32.totalorder %s108, %s111
    %p120 = scmp.eq.s32.totalorder %s15, 3
    %p121 = por %p119, %p120
    %p122 = scmp.ne.s32.totalorder %s111, %s112
    %p123 = scmp.eq.s32.totalorder %s15, 0
    %p124 = por %p122, %p123
    %p125 = scmp.ne.s32.totalorder %s111, %s112
    %p126 = scmp.eq.s32.totalorder %s16, 3
    %p127 = por %p125, %p126
    %p129 = scmp.ne.s32.totalorder %s112, %s128
    %p130 = scmp.eq.s32.totalorder %s16, 0
    %p131 = por %p129, %p130
    %s132 = ssub.s32 %s17, %s43
    %s133 = ssub.s32 %s18, %s39
    %s134 = sor.u32 %s132, %s133
    %p135 = scmp.eq.s32.totalorder %s134, 0
    %s137 = sadd.s32 %s136, 1
    %s138 = scalar_select %p135, %s136, %s137
    %p141 = pneg %p135
    %p142 = scmp.eq.s32.totalorder %s10, 3
    %p143 = por %p141, %p142
    %p144 = scmp.ne.s32.totalorder %s136, %s139
    %p145 = scmp.eq.s32.totalorder %s10, 0
    %p146 = por %p144, %p145
    %p147 = scmp.ne.s32.totalorder %s136, %s139
    %p148 = scmp.eq.s32.totalorder %s15, 3
    %p149 = por %p147, %p148
    %p150 = scmp.ne.s32.totalorder %s139, %s140
    %p151 = scmp.eq.s32.totalorder %s15, 0
    %p152 = por %p150, %p151
    %p153 = scmp.ne.s32.totalorder %s139, %s140
    %p154 = scmp.eq.s32.totalorder %s16, 3
    %p155 = por %p153, %p154
    %p157 = scmp.ne.s32.totalorder %s140, %s156
    %p158 = scmp.eq.s32.totalorder %s16, 0
    %p159 = por %p157, %p158
    %p160 = scmp.le.s32.totalorder 1, %s10
    %p161 = scmp.lt.s32.totalorder %s10, 5
    %p162 = pnand %p160, %p161
    %p163 = pneg %p162
    // Predicated region
    $region9: #{chamfer_distance_l2.1} parent=5 // pred_check
      _
    $region10: #{chamfer_distance_l2.1} parent=5 // pred_check_branch
      %165 = sbr.rel (%p162) target = $region12
    $region11: #{chamfer_distance_l2.1} parent=5 // pred_region
      %s166 = ssub.s32 %s10, 1
    $region12: #{chamfer_distance_l2.1} parent=5 // pred_fallthru
      _
    %p167 = scmp.lt.s32.totalorder %s10, 4
    // Predicated region
    $region13: #{chamfer_distance_l2.1} parent=5 // pred_check
      %p168 = pneg %p167
    $region14: #{chamfer_distance_l2.1} parent=5 // pred_check_branch
      %170 = sbr.rel (%p168) target = $region16
    $region15: #{chamfer_distance_l2.1} parent=5 // pred_region
      // Predicated region
      $region17: #{chamfer_distance_l2.1} parent=15 // pred_check
        %p171 = pneg %p58
      $region18: #{chamfer_distance_l2.1} parent=15 // pred_check_branch
        %173 = sbr.rel (%p171) target = $region20
      $region19: #{chamfer_distance_l2.1} parent=15 // pred_region
        %s174 = smul.u32 16, %s19
        %p175 = scmp.lt.s32.totalorder %s17, 1
        %s176 = scalar_select %p175, %s17, 1
        %p177 = scmp.lt.s32.totalorder %s174, 15
        %s178 = scalar_select %p177, %s174, 15
        %s179 = smul.addr %s176, 16
        %s180 = sadd.s32 %s178, %s179
        %s181 = smul.addr %s180, 8
        %s182 = scalar_lea.vmem %s0, %s181
        %s183 = smul.u32 16, %s19
      $region20: #{chamfer_distance_l2.1} parent=15 // pred_fallthru
        _
      // Predicated region
      $region21: #{chamfer_distance_l2.1} parent=15 // pred_check
        %p184 = pneg %p88
      $region22: #{chamfer_distance_l2.1} parent=15 // pred_check_branch
        %186 = sbr.rel (%p184) target = $region24
      $region23: #{chamfer_distance_l2.1} parent=15 // pred_region
        %p187 = scmp.lt.s32.totalorder %s17, 1
        %s188 = scalar_select %p187, %s17, 1
        %p189 = scmp.lt.s32.totalorder %s18, 1
        %s190 = scalar_select %p189, %s18, 1
        %p191 = scmp.lt.s32.totalorder %s20, 0
        %s192 = scalar_select %p191, %s20, 0
        %s193 = sadd.s32 %s192, %s190
        %s194 = smul.addr %s188, 2
        %s195 = sadd.s32 %s193, %s194
        %s196 = smul.addr %s195, 4
        %s197 = scalar_lea.vmem %s1, %s196
      $region24: #{chamfer_distance_l2.1} parent=15 // pred_fallthru
        _
    $region16: #{chamfer_distance_l2.1} parent=5 // pred_fallthru
      _
    %p198 = scmp.le.s32.totalorder 1, %s10
    %p199 = scmp.lt.s32.totalorder %s10, 5
    %p200 = pnand %p198, %p199
    %p201 = pneg %p200
    // Predicated region
    $region25: #{chamfer_distance_l2.1} parent=5 // pred_check
      _
    $region26: #{chamfer_distance_l2.1} parent=5 // pred_check_branch
      %203 = sbr.rel (%p200) target = $region28
    $region27: #{chamfer_distance_l2.1} parent=5 // pred_region
      %s204 = ssub.s32 %s10, 1
      %s205 = smul.u32 16, %s23
      %p206 = scmp.lt.s32.totalorder %s21, 1
      %s207 = scalar_select %p206, %s21, 1
      %p208 = scmp.lt.s32.totalorder %s205, 15
      %s209 = scalar_select %p208, %s205, 15
      %s210 = smul.addr %s207, 16
      %s211 = sadd.s32 %s209, %s210
      %s212 = smul.addr %s211, 8
      %s213 = scalar_lea.vmem %s0, %s212
      %p214 = pneg %p64
      %p215 = pneg %p61
      %p216 = scmp.lt.s32.totalorder %s21, 1
      %s217 = scalar_select %p216, %s21, 1
      %p218 = scmp.lt.s32.totalorder %s22, 1
      %s219 = scalar_select %p218, %s22, 1
      %p220 = scmp.lt.s32.totalorder %s24, 0
      %s221 = scalar_select %p220, %s24, 0
      %s222 = sadd.s32 %s221, %s219
      %s223 = smul.addr %s217, 2
      %s224 = sadd.s32 %s222, %s223
      %s225 = smul.addr %s224, 4
      %s226 = scalar_lea.vmem %s1, %s225
      %p227 = pneg %p94
      %p228 = pneg %p91
      %p229 = pneg %p124
      %p230 = pneg %p121
      %s231 = smul.u32 16, %s23
      %p232 = scmp.lt.s32.totalorder %s21, 1
      %s233 = scalar_select %p232, %s21, 1
      %p234 = scmp.lt.s32.totalorder %s22, 1
      %s235 = scalar_select %p234, %s22, 1
      %p236 = scmp.lt.s32.totalorder %s231, 15
      %s237 = scalar_select %p236, %s231, 15
      %s238 = smul.addr %s235, 16
      %s239 = sadd.s32 %s237, %s238
      %s240 = smul.addr %s233, 32
      %s241 = sadd.s32 %s239, %s240
      %s242 = smul.addr %s241, 8
      %s243 = scalar_lea.vmem %s2, %s242
      %p244 = pneg %p152
      %p245 = pneg %p149
      %p246 = scmp.lt.s32.totalorder %s21, 1
      %s247 = scalar_select %p246, %s21, 1
      %p248 = scmp.lt.s32.totalorder %s22, 1
      %s249 = scalar_select %p248, %s22, 1
      %s250 = smul.addr %s247, 2
      %s251 = sadd.s32 %s249, %s250
      %s252 = scalar_lea.vmem %s3, %s251
      %s253 = smul.u32 16, %s23
      %p254 = scmp.lt.s32.totalorder %s21, 1
      %s255 = scalar_select %p254, %s21, 1
      %p256 = scmp.lt.s32.totalorder %s253, 15
      %s257 = scalar_select %p256, %s253, 15
      %s258 = smul.addr %s255, 16
      %s259 = sadd.s32 %s257, %s258
      %s260 = smul.addr %s259, 8
      %s261 = scalar_lea.vmem %s0, %s260
      %s262 = smul.u32 16, %s23
      %p263 = scmp.lt.s32.totalorder %s21, 1
      %s264 = scalar_select %p263, %s21, 1
      %p265 = scmp.lt.s32.totalorder %s22, 1
      %s266 = scalar_select %p265, %s22, 1
      %p267 = scmp.lt.s32.totalorder %s24, 0
      %s268 = scalar_select %p267, %s24, 0
      %s269 = sadd.s32 %s268, %s266
      %s270 = smul.addr %s264, 2
      %s271 = sadd.s32 %s269, %s270
      %s272 = smul.addr %s271, 4
      %s273 = scalar_lea.vmem %s1, %s272
      %s274 = smul.u32 16, %s23
      %p275 = scmp.lt.s32.totalorder %s21, 1
      %s276 = scalar_select %p275, %s21, 1
      %p277 = scmp.lt.s32.totalorder %s22, 1
      %s278 = scalar_select %p277, %s22, 1
      %p279 = scmp.lt.s32.totalorder %s274, 15
      %s280 = scalar_select %p279, %s274, 15
      %s281 = smul.addr %s278, 16
      %s282 = sadd.s32 %s280, %s281
      %s283 = smul.addr %s276, 32
      %s284 = sadd.s32 %s282, %s283
      %s285 = smul.addr %s284, 8
      %s286 = scalar_lea.vmem %s2, %s285
      %s287 = smul.u32 16, %s23
      %p288 = scmp.lt.s32.totalorder %s21, 1
      %s289 = scalar_select %p288, %s21, 1
      %p290 = scmp.lt.s32.totalorder %s22, 1
      %s291 = scalar_select %p290, %s22, 1
      %s292 = smul.addr %s289, 2
      %s293 = sadd.s32 %s291, %s292
      %s294 = scalar_lea.vmem %s3, %s293
      %p295 = scmp.eq.s32.totalorder %s23, 0
      %p296 = scmp.eq.s32.totalorder %s24, 0
      %p297 = pnand %p295, %p296
      %p298 = pneg %p297
      // Predicated region
      $region29: #{chamfer_distance_l2.1} parent=27 // pred_check
        _
      $region30: #{chamfer_distance_l2.1} parent=27 // pred_check_branch
        %300 = sbr.rel (%p297) target = $region32
      $region31: #{chamfer_distance_l2.1} parent=27 // pred_region
        %vm301 = vcmask 0
        %302 = vst.msk [vmem:[%s294] sm:$0x1] %vm301, 0.0
      $region32: #{chamfer_distance_l2.1} parent=27 // pred_fallthru
        _
      // Predicated region
      $region33: #{chamfer_distance_l2.1} parent=27 // pred_check
        %p303 = pneg %p296
      $region34: #{chamfer_distance_l2.1} parent=27 // pred_check_branch
        %305 = sbr.rel (%p303) target = $region36
      $region35: #{chamfer_distance_l2.1} parent=27 // pred_region
        %vm306 = vcmask 7168
        %307 = vst.msk [vmem:[#allocation2] sm:$0xff] %vm306, inf
        %308 = vst.msk [vmem:[#allocation2 + $0x8] sm:$0xff] %vm306, inf
        %309 = vst.msk [vmem:[#allocation2 + $0x10] sm:$0xff] %vm306, inf
        %310 = vst.msk [vmem:[#allocation2 + $0x18] sm:$0xff] %vm306, inf
        %311 = vst.msk [vmem:[#allocation2 + $0x20] sm:$0xff] %vm306, inf
        %312 = vst.msk [vmem:[#allocation2 + $0x28] sm:$0xff] %vm306, inf
        %313 = vst.msk [vmem:[#allocation2 + $0x30] sm:$0xff] %vm306, inf
        %314 = vst.msk [vmem:[#allocation2 + $0x38] sm:$0xff] %vm306, inf
        %315 = vst.msk [vmem:[#allocation2 + $0x40] sm:$0xff] %vm306, inf
        %316 = vst.msk [vmem:[#allocation2 + $0x48] sm:$0xff] %vm306, inf
        %317 = vst.msk [vmem:[#allocation2 + $0x50] sm:$0xff] %vm306, inf
        %318 = vst.msk [vmem:[#allocation2 + $0x58] sm:$0xff] %vm306, inf
        %319 = vst.msk [vmem:[#allocation2 + $0x60] sm:$0xff] %vm306, inf
        %320 = vst.msk [vmem:[#allocation2 + $0x68] sm:$0xff] %vm306, inf
        %321 = vst.msk [vmem:[#allocation2 + $0x70] sm:$0xff] %vm306, inf
        %322 = vst.msk [vmem:[#allocation2 + $0x78] sm:$0xff] %vm306, inf
      $region36: #{chamfer_distance_l2.1} parent=27 // pred_fallthru
        _
      loop: start=0, step=1, limit=8
      $region37: #{chamfer_distance_l2.1} parent=27 // loop_pre_header
        _
      $region38: #{chamfer_distance_l2.1} parent=27 // loop_header
        %s324 = sphi 0, %s328
        %p325 = scmp.ge.s32.totalorder %s324, 8
        %v329 = vphi inf, %v410
      $region39: #{chamfer_distance_l2.1} parent=27 // loop_header_branch
        %327 = sbr.rel (%p325) target = $region43
      $region40: #{chamfer_distance_l2.1} parent=27 // loop_body
        %s330 = smul.u32 %s324, 16
        %s331 = scalar_lea.vmem %s261, %s330
        %v332 = vld [vmem:[%s331] sm:$0xff]
        %v333 = vld [vmem:[%s331 + $0x8] sm:$0xff]
        %v334 = vld [vmem:[%s273] sm:$0x1]
        %336 = vset.pattern.permute.xlu0 0
        %337 = vperm.xlu0 %336, %v332
        %v338 = vpop.permute.xlu0 %337
        %341 = vset.pattern.permute.xlu0 0
        %342 = vperm.xlu0 %341, %v333
        %v343 = vpop.permute.xlu0 %342
        %v345 = vlaneseq
        %v346 = vshrl.u32 %v345, 7
        %v347 = vsub.s32 0, %v346
        %v348 = vrot.slane %v334, %v347
        %v349 = vsub.f32 %v338, %v348
        %v350 = vsub.f32 %v343, %v348
        %v351 = vmul.f32 %v349, %v349
        %v352 = vmul.f32 %v350, %v350
        %v353 = vld [vmem:[%s273 + $0x1] sm:$0x1]
        %354 = vset.pattern.permute.xlu0 1
        %355 = vperm.xlu0 %354, %v332
        %v356 = vpop.permute.xlu0 %355
        %358 = vset.pattern.permute.xlu0 1
        %359 = vperm.xlu0 %358, %v333
        %v360 = vpop.permute.xlu0 %359
        %v362 = vlaneseq
        %v363 = vshrl.u32 %v362, 7
        %v364 = vsub.s32 0, %v363
        %v365 = vrot.slane %v353, %v364
        %v366 = vsub.f32 %v356, %v365
        %v367 = vsub.f32 %v360, %v365
        %v368 = vmul.f32 %v366, %v366
        %v369 = vmul.f32 %v367, %v367
        %v370 = vadd.f32 %v351, %v368
        %v371 = vadd.f32 %v352, %v369
        %v372 = vld [vmem:[%s273 + $0x2] sm:$0x1]
        %373 = vset.pattern.permute.xlu0 2
        %374 = vperm.xlu0 %373, %v332
        %v375 = vpop.permute.xlu0 %374
        %377 = vset.pattern.permute.xlu0 2
        %378 = vperm.xlu0 %377, %v333
        %v379 = vpop.permute.xlu0 %378
        %v381 = vlaneseq
        %v382 = vshrl.u32 %v381, 7
        %v383 = vsub.s32 0, %v382
        %v384 = vrot.slane %v372, %v383
        %v385 = vsub.f32 %v375, %v384
        %v386 = vsub.f32 %v379, %v384
        %v387 = vmul.f32 %v385, %v385
        %v388 = vmul.f32 %v386, %v386
        %v389 = vadd.f32 %v370, %v387
        %v390 = vadd.f32 %v371, %v388
        %391 = vmin.xlane.f32.xlu0 %v389
        %v392 = vpop.xlane.xlu0 %391
        %393 = vmin.xlane.f32.xlu0 %v390
        %v394 = vpop.xlane.xlu0 %393
        %s395 = scalar_lea.vmem [#allocation2], %s330
        %v396 = vld [vmem:[%s395] sm:$0xff]
        %v397 = vld [vmem:[%s395 + $0x8] sm:$0xff]
        %v398 = vmin.f32 %v396, %v392
        %v399 = vmin.f32 %v397, %v394
        %vm400 = vcmask 7168
        %401 = vst.msk [vmem:[%s395] sm:$0xff] %vm400, %v398
        %402 = vst.msk [vmem:[%s395 + $0x8] sm:$0xff] %vm400, %v399
        %v403 = vmin.f32 %v389, %v390
        %v404 = vrot.slane %v403, 4
        %v405 = vmin.f32 %v403, %v404
        %v406 = vrot.slane %v405, 2
        %v407 = vmin.f32 %v405, %v406
        %v408 = vrot.slane %v407, 1
        %v409 = vmin.f32 %v407, %v408
        %v410 = vmin.f32 %v329, %v409
      $region41: #{chamfer_distance_l2.1} parent=27 // loop_footer
        %s328 = sadd.s32 1, %s324
      $region42: #{chamfer_distance_l2.1} parent=27 // loop_footer_branch
        %323 = sbr.rel target = $region38
      $region43: #{chamfer_distance_l2.1} parent=27 // loop_exit
        _
      %s411 = smul.u32 %s24, 128
      // Predicated region
      $region44: #{chamfer_distance_l2.1} parent=27 // pred_check
        %p412 = pneg %p295
      $region45: #{chamfer_distance_l2.1} parent=27 // pred_check_branch
        %414 = sbr.rel (%p412) target = $region47
      $region46: #{chamfer_distance_l2.1} parent=27 // pred_region
        %s415 = sshra.s32 %s411, 7
        %s416 = sand.u32 %s411, 127
        %s417 = scalar_lea.vmem [#allocation3], %s415
        %418 = vst [vmem:[%s417] sm:$0x1] %v329
      $region47: #{chamfer_distance_l2.1} parent=27 // pred_fallthru
        _
      %p419 = scmp.ne.s32.totalorder %s23, 0
      // Predicated region
      $region48: #{chamfer_distance_l2.1} parent=27 // pred_check
        %p420 = pneg %p419
      $region49: #{chamfer_distance_l2.1} parent=27 // pred_check_branch
        %422 = sbr.rel (%p420) target = $region51
      $region50: #{chamfer_distance_l2.1} parent=27 // pred_region
        %s423 = sshra.s32 %s411, 7
        %s424 = sand.u32 %s411, 127
        %s425 = scalar_lea.vmem [#allocation3], %s423
        %v426 = vld [vmem:[%s425] sm:$0x1]
        %v427 = vmin.f32 %v426, %v329
        %428 = vst [vmem:[%s425] sm:$0x1] %v427
      $region51: #{chamfer_distance_l2.1} parent=27 // pred_fallthru
        _
      // Predicated region
      $region52: #{chamfer_distance_l2.1} parent=27 // pred_check
        %p429 = pneg %p296
      $region53: #{chamfer_distance_l2.1} parent=27 // pred_check_branch
        %431 = sbr.rel (%p429) target = $region55
      $region54: #{chamfer_distance_l2.1} parent=27 // pred_region
        %v432 = vld [vmem:[#allocation2] sm:$0xff]
        %v433 = vld [vmem:[#allocation2 + $0x8] sm:$0xff]
        %v434 = vld [vmem:[#allocation2 + $0x10] sm:$0xff]
        %v435 = vld [vmem:[#allocation2 + $0x18] sm:$0xff]
        %v436 = vld [vmem:[#allocation2 + $0x20] sm:$0xff]
        %v437 = vld [vmem:[#allocation2 + $0x28] sm:$0xff]
        %v438 = vld [vmem:[#allocation2 + $0x30] sm:$0xff]
        %v439 = vld [vmem:[#allocation2 + $0x38] sm:$0xff]
        %v440 = vld [vmem:[#allocation2 + $0x40] sm:$0xff]
        %v441 = vld [vmem:[#allocation2 + $0x48] sm:$0xff]
        %v442 = vld [vmem:[#allocation2 + $0x50] sm:$0xff]
        %v443 = vld [vmem:[#allocation2 + $0x58] sm:$0xff]
        %v444 = vld [vmem:[#allocation2 + $0x60] sm:$0xff]
        %v445 = vld [vmem:[#allocation2 + $0x68] sm:$0xff]
        %v446 = vld [vmem:[#allocation2 + $0x70] sm:$0xff]
        %v447 = vld [vmem:[#allocation2 + $0x78] sm:$0xff]
        %vm448 = vcmask 7168
        %449 = vst.msk [vmem:[%s286] sm:$0xff] %vm448, %v432
        %450 = vst.msk [vmem:[%s286 + $0x8] sm:$0xff] %vm448, %v433
        %451 = vst.msk [vmem:[%s286 + $0x10] sm:$0xff] %vm448, %v434
        %452 = vst.msk [vmem:[%s286 + $0x18] sm:$0xff] %vm448, %v435
        %453 = vst.msk [vmem:[%s286 + $0x20] sm:$0xff] %vm448, %v436
        %454 = vst.msk [vmem:[%s286 + $0x28] sm:$0xff] %vm448, %v437
        %455 = vst.msk [vmem:[%s286 + $0x30] sm:$0xff] %vm448, %v438
        %456 = vst.msk [vmem:[%s286 + $0x38] sm:$0xff] %vm448, %v439
        %457 = vst.msk [vmem:[%s286 + $0x40] sm:$0xff] %vm448, %v440
        %458 = vst.msk [vmem:[%s286 + $0x48] sm:$0xff] %vm448, %v441
        %459 = vst.msk [vmem:[%s286 + $0x50] sm:$0xff] %vm448, %v442
        %460 = vst.msk [vmem:[%s286 + $0x58] sm:$0xff] %vm448, %v443
        %461 = vst.msk [vmem:[%s286 + $0x60] sm:$0xff] %vm448, %v444
        %462 = vst.msk [vmem:[%s286 + $0x68] sm:$0xff] %vm448, %v445
        %463 = vst.msk [vmem:[%s286 + $0x70] sm:$0xff] %vm448, %v446
        %464 = vst.msk [vmem:[%s286 + $0x78] sm:$0xff] %vm448, %v447
      $region55: #{chamfer_distance_l2.1} parent=27 // pred_fallthru
        _
      // Predicated region
      $region56: #{chamfer_distance_l2.1} parent=27 // pred_check
        %p465 = pneg %p295
      $region57: #{chamfer_distance_l2.1} parent=27 // pred_check_branch
        %467 = sbr.rel (%p465) target = $region59
      $region58: #{chamfer_distance_l2.1} parent=27 // pred_region
        %v468 = vlaneseq
        %v469 = vand.u32 %v468, 127
        %s470 = smul.u32 %s22, 128
        %v471 = vstv %s470
        %v472 = vadd.s32 %v469, %v471
        %v473 = vstv %s411
        %v474 = vadd.s32 %v472, %v473
        %s475 = sshra.s32 %s411, 7
        %s476 = sand.u32 %s411, 127
        %s477 = scalar_lea.vmem [#allocation3], %s475
        %v478 = vld [vmem:[%s477] sm:$0x1]
        %v479 = vld [vmem:[%s294] sm:$0x1]
        %vm480 = vcmp.lt.s32.totalorder %v474, 64
        %v481 = vsel %vm480, %v478, 0.0
        %vm482 = vcmask 1040384
        %v483 = vsel %vm482, %v481, 0.0
        %484 = vadd.xlane.f32.xlu0 %v483
        %v485 = vpop.xlane.xlu0 %484
        %v486 = vrot.slane %v485, 4
        %v487 = vadd.f32 %v485, %v486
        %v488 = vrot.slane %v487, 2
        %v489 = vadd.f32 %v487, %v488
        %v490 = vrot.slane %v489, 1
        %v491 = vadd.f32 %v489, %v490
        %s492 = vtos %v491
        %v493 = vstv %s492
        %v494 = vadd.f32 %v479, %v493
        %vm495 = vcmask 0
        %496 = vst.msk [vmem:[%s294] sm:$0x1] %vm495, %v494
      $region59: #{chamfer_distance_l2.1} parent=27 // pred_fallthru
        _
      %s497 = smul.u32 16, %s23
      %p498 = scmp.lt.s32.totalorder %s21, 1
      %s499 = scalar_select %p498, %s21, 1
      %p500 = scmp.lt.s32.totalorder %s22, 1
      %s501 = scalar_select %p500, %s22, 1
      %p502 = scmp.lt.s32.totalorder %s497, 15
      %s503 = scalar_select %p502, %s497, 15
      %s504 = smul.addr %s501, 16
      %s505 = sadd.s32 %s503, %s504
      %s506 = smul.addr %s499, 32
      %s507 = sadd.s32 %s505, %s506
      %s508 = smul.addr %s507, 8
      %s509 = scalar_lea.vmem %s2, %s508
      %p510 = scmp.lt.s32.totalorder %s21, 1
      %s511 = scalar_select %p510, %s21, 1
      %p512 = scmp.lt.s32.totalorder %s22, 1
      %s513 = scalar_select %p512, %s22, 1
      %s514 = smul.addr %s511, 2
      %s515 = sadd.s32 %s513, %s514
      %s516 = scalar_lea.vmem %s3, %s515
      // Predicated region
      $region60: #{chamfer_distance_l2.1} parent=27 // pred_check
        %p517 = pneg %p121
      $region61: #{chamfer_distance_l2.1} parent=27 // pred_check_branch
        %519 = sbr.rel (%p517) target = $region63
      $region62: #{chamfer_distance_l2.1} parent=27 // pred_region
        %s520 = smul.u32 16, %s23
      $region63: #{chamfer_distance_l2.1} parent=27 // pred_fallthru
        _
      // Predicated region
      $region64: #{chamfer_distance_l2.1} parent=27 // pred_check
        %p521 = pneg %p149
      $region65: #{chamfer_distance_l2.1} parent=27 // pred_check_branch
        %523 = sbr.rel (%p521) target = $region67
      $region66: #{chamfer_distance_l2.1} parent=27 // pred_region
        _
      $region67: #{chamfer_distance_l2.1} parent=27 // pred_fallthru
        _
    $region28: #{chamfer_distance_l2.1} parent=5 // pred_fallthru
      _
    %p524 = scmp.le.s32.totalorder 2, %s10
    // Predicated region
    $region68: #{chamfer_distance_l2.1} parent=5 // pred_check
      %p525 = pneg %p524
    $region69: #{chamfer_distance_l2.1} parent=5 // pred_check_branch
      %527 = sbr.rel (%p525) target = $region71
    $region70: #{chamfer_distance_l2.1} parent=5 // pred_region
      %s528 = ssub.s32 %s10, 2
      // Predicated region
      $region72: #{chamfer_distance_l2.1} parent=70 // pred_check
        %p529 = pneg %p127
      $region73: #{chamfer_distance_l2.1} parent=70 // pred_check_branch
        %531 = sbr.rel (%p529) target = $region75
      $region74: #{chamfer_distance_l2.1} parent=70 // pred_region
        %s532 = smul.u32 16, %s27
        %p533 = scmp.lt.s32.totalorder %s25, 1
        %s534 = scalar_select %p533, %s25, 1
        %p535 = scmp.lt.s32.totalorder %s26, 1
        %s536 = scalar_select %p535, %s26, 1
        %p537 = scmp.lt.s32.totalorder %s532, 15
        %s538 = scalar_select %p537, %s532, 15
        %s539 = smul.addr %s536, 16
        %s540 = sadd.s32 %s538, %s539
        %s541 = smul.addr %s534, 32
        %s542 = sadd.s32 %s540, %s541
        %s543 = smul.addr %s542, 8
        %s544 = scalar_lea.vmem %s2, %s543
      $region75: #{chamfer_distance_l2.1} parent=70 // pred_fallthru
        _
      // Predicated region
      $region76: #{chamfer_distance_l2.1} parent=70 // pred_check
        %p545 = pneg %p155
      $region77: #{chamfer_distance_l2.1} parent=70 // pred_check_branch
        %547 = sbr.rel (%p545) target = $region79
      $region78: #{chamfer_distance_l2.1} parent=70 // pred_region
        %p548 = scmp.lt.s32.totalorder %s25, 1
        %s549 = scalar_select %p548, %s25, 1
        %p550 = scmp.lt.s32.totalorder %s26, 1
        %s551 = scalar_select %p550, %s26, 1
        %s552 = smul.addr %s549, 2
        %s553 = sadd.s32 %s551, %s552
        %s554 = scalar_lea.vmem %s3, %s553
      $region79: #{chamfer_distance_l2.1} parent=70 // pred_fallthru
        _
    $region71: #{chamfer_distance_l2.1} parent=5 // pred_fallthru
      _
  $region6: #{chamfer_distance_l2.1} parent=0 // loop_footer
    %s14 = sadd.s32 1, %s10
  $region7: #{chamfer_distance_l2.1} parent=0 // loop_footer_branch
    %9 = sbr.rel target = $region3
  $region8: #{chamfer_distance_l2.1} parent=0 // loop_exit
    _

</llo_original>
